<compile_context>
chip_gen: v6e
topology: v6e:2x2x1
jax: 0.10.0
libtpu: 0.0.40
codegen_flags: <defaults>
</compile_context>

<pallas_src>
import jax
import jax.numpy as jnp
from jax.experimental import pallas as pl
from jax.experimental.pallas import tpu as pltpu

NUM_DIR = 8
INPUT_SIZE = NUM_DIR           # 8
HIDDEN_SIZE = INPUT_SIZE * 2   # 16
OUTPUT_SIZE = NUM_DIR          # 8

_LANE = 128
_PACK = _LANE // INPUT_SIZE    # 16 samples per 128-lane row
_EXP_IN = _PACK * INPUT_SIZE   # 128
_EXP_HID = _PACK * HIDDEN_SIZE # 256
_EXP_OUT = _PACK * OUTPUT_SIZE # 128

# Packed rows per grid step.  4096 rows = 65536 samples = 2 MiB x tile;
# total VMEM (double-buffered x/out + hidden temp + resident weights) ~16-20 MiB,
# safe on v5e (128 MiB), v6e (128 MiB) and v7x (64 MiB).
_ROW_TILE_CAP = 4096


def _round_up(a, m):
    return ((a + m - 1) // m) * m


def dqn_kernel(x_ref, bd1_ref, b1_ref, bd2_ref, b2_ref, o_ref):
    # x_ref : (R, 128)   -- 16 samples per row, 8 features each (lane-dense)
    # bd1   : (128, 256) -- kron(I16, w1.T), resident
    # b1    : (1, 256)   -- tile(b1, 16),    resident
    # bd2   : (256, 128) -- kron(I16, w2.T), resident
    # b2    : (1, 128)   -- tile(b2, 16),    resident
    # o_ref : (R, 128)   -- 16 samples per row, 8 outputs each (lane-dense)
    h = jnp.dot(x_ref[...], bd1_ref[...], preferred_element_type=jnp.float32)
    h = jnp.maximum(h + b1_ref[...], 0.0)                     # ReLU on f32 acc
    out = jnp.dot(h, bd2_ref[...], preferred_element_type=jnp.float32)
    o_ref[...] = (out + b2_ref[...]).astype(o_ref.dtype)


def _choose_row_tile(rows):
    if rows <= 8:
        return rows                       # single full-extent block
    # At least two grid steps so the ("parallel",) axis feeds both v7x cores;
    # second-minor block dim kept a multiple of 8.
    half = _round_up(pl.cdiv(rows, 2), 8)
    return min(_ROW_TILE_CAP, half)


def dqn_forward(x, w1, b1, w2, b2):
    """relu(x @ w1.T + b1) @ w2.T + b2  (PyTorch nn.Linear layout params).

    x: (B, 8) f32; w1: (16, 8); b1: (16,); w2: (8, 16); b2: (8,).
    """
    B = x.shape[0]

    # Pack 16 samples per 128-lane row.  The reshape is a zero-copy,
    # row-major view; a (cheap, tail-only) pad is needed only when B % 16 != 0.
    Bp = _round_up(B, _PACK)
    if Bp != B:
        x = jnp.pad(x, ((0, Bp - B), (0, 0)))
    rows = Bp // _PACK
    xp = x.reshape(rows, _EXP_IN)

    # Block-diagonal expanded weights: one lane-dense matmul per layer handles
    # 16 independent samples at once.  Built once per call (tiny).
    eye = jnp.eye(_PACK, dtype=x.dtype)
    bd1 = jnp.kron(eye, w1.T.astype(x.dtype))                      # (128, 256)
    bd2 = jnp.kron(eye, w2.T.astype(x.dtype))                      # (256, 128)
    b1t = jnp.tile(b1.reshape(-1), _PACK).reshape(1, _EXP_HID).astype(x.dtype)
    b2t = jnp.tile(b2.reshape(-1), _PACK).reshape(1, _EXP_OUT).astype(x.dtype)

    rt = _choose_row_tile(rows)
    grid = (pl.cdiv(rows, rt),)           # ragged last tile handled by Pallas

    cost = pl.CostEstimate(
        flops=4 * rows * _EXP_IN * _EXP_HID,
        transcendentals=0,
        bytes_accessed=rows * (_EXP_IN + _EXP_OUT) * 4
        + (bd1.size + bd2.size + b1t.size + b2t.size) * 4,
    )

    out = pl.pallas_call(
        dqn_kernel,
        out_shape=jax.ShapeDtypeStruct((rows, _EXP_OUT), x.dtype),
        grid_spec=pltpu.PrefetchScalarGridSpec(
            num_scalar_prefetch=0,
            grid=grid,
            in_specs=[
                # streamed activations: new packed-row tile per grid step
                pl.BlockSpec((rt, _EXP_IN), lambda i: (i, 0)),
                # weights / biases: resident (same block every step -> one DMA)
                pl.BlockSpec((_EXP_IN, _EXP_HID), lambda i: (0, 0)),
                pl.BlockSpec((1, _EXP_HID), lambda i: (0, 0)),
                pl.BlockSpec((_EXP_HID, _EXP_OUT), lambda i: (0, 0)),
                pl.BlockSpec((1, _EXP_OUT), lambda i: (0, 0)),
            ],
            out_specs=pl.BlockSpec((rt, _EXP_OUT), lambda i: (i, 0)),
        ),
        compiler_params=pltpu.CompilerParams(
            dimension_semantics=("parallel",),   # v7x: split row tiles across TCs
            vmem_limit_bytes=40 << 20,
        ),
        cost_estimate=cost,
    )(xp, bd1, b1t, bd2, b2t)

    # Zero-copy view back to (B, 8); drop the (at most 15-row) packing pad.
    return out.reshape(Bp, OUTPUT_SIZE)[:B]


def init_params(key):
    """nn.Linear default init (U[-1/sqrt(fan_in), 1/sqrt(fan_in)]), PyTorch layout."""
    k1, k2, k3, k4 = jax.random.split(key, 4)
    bound1 = 1.0 / float(INPUT_SIZE) ** 0.5
    bound2 = 1.0 / float(HIDDEN_SIZE) ** 0.5
    w1 = jax.random.uniform(k1, (HIDDEN_SIZE, INPUT_SIZE), jnp.float32, -bound1, bound1)
    b1 = jax.random.uniform(k2, (HIDDEN_SIZE,), jnp.float32, -bound1, bound1)
    w2 = jax.random.uniform(k3, (OUTPUT_SIZE, HIDDEN_SIZE), jnp.float32, -bound2, bound2)
    b2 = jax.random.uniform(k4, (OUTPUT_SIZE,), jnp.float32, -bound2, bound2)
    return w1, b1, w2, b2


def reference_forward(x, w1, b1, w2, b2):
    h = jnp.maximum(x @ w1.T + b1, 0.0)
    return h @ w2.T + b2


if __name__ == "__main__":
    key = jax.random.PRNGKey(0)
    kx, kp, kx2 = jax.random.split(key, 3)
    w1, b1, w2, b2 = init_params(kp)

    fwd = jax.jit(dqn_forward)

    # Small-batch check (module-consistent shape); exercises the B % 16 tail path.
    B = 8
    x = jax.random.normal(kx, (B, INPUT_SIZE), jnp.float32)
    out = jax.block_until_ready(fwd(x, w1, b1, w2, b2))
    ref = reference_forward(x, w1, b1, w2, b2)
    assert out.shape == (B, OUTPUT_SIZE)
    # Tolerance chosen to stay robust even if the MXU evaluates the f32 matmul
    # via a bf16 pass; structural errors would be orders of magnitude larger.
    assert jnp.allclose(out, ref, atol=1e-2, rtol=1e-2), "mismatch vs reference (B=8)"

    # Multi-grid-step check: 4096 samples -> 256 packed rows -> 2 parallel tiles.
    B2 = 4096
    x2 = jax.random.normal(kx2, (B2, INPUT_SIZE), jnp.float32)
    out2 = jax.block_until_ready(fwd(x2, w1, b1, w2, b2))
    ref2 = reference_forward(x2, w1, b1, w2, b2)
    assert out2.shape == (B2, OUTPUT_SIZE)
    assert jnp.allclose(out2, ref2, atol=1e-2, rtol=1e-2), "mismatch vs reference (B=4096)"

    print("KERNEL_OK")
</pallas_src>

<mosaic_0001>
module attributes {stable_mosaic.version = 11 : i64} {
  func.func @dqn_kernel(%arg0: i32, %arg1: memref<1x128xf32, #tpu.memory_space<vmem>>, %arg2: memref<128x256xf32, #tpu.memory_space<vmem>>, %arg3: memref<1x256xf32, #tpu.memory_space<vmem>>, %arg4: memref<256x128xf32, #tpu.memory_space<vmem>>, %arg5: memref<1x128xf32, #tpu.memory_space<vmem>>, %arg6: memref<1x128xf32, #tpu.memory_space<vmem>>) attributes {dimension_semantics = [#tpu.dimension_semantics<parallel>], iteration_bounds = array<i64: 1>, scalar_prefetch = 0 : i64, scratch_operands = 0 : i64, tpu.core_type = #tpu.core_type<tc>, window_params = [{transform_indices = @transform_0, window_bounds = array<i64: 1, 128>}, {pipeline_mode = #tpu.pipeline_mode<synchronous>, transform_indices = @transform_1, window_bounds = array<i64: 128, 256>}, {pipeline_mode = #tpu.pipeline_mode<synchronous>, transform_indices = @transform_2, window_bounds = array<i64: 1, 256>}, {pipeline_mode = #tpu.pipeline_mode<synchronous>, transform_indices = @transform_3, window_bounds = array<i64: 256, 128>}, {pipeline_mode = #tpu.pipeline_mode<synchronous>, transform_indices = @transform_4, window_bounds = array<i64: 1, 128>}, {transform_indices = @transform_5, window_bounds = array<i64: 1, 128>}]} {
    %c0 = arith.constant 0 : index
    %c0_0 = arith.constant 0 : index
    %0 = vector.load %arg1[%c0, %c0_0] : memref<1x128xf32, #tpu.memory_space<vmem>>, vector<1x128xf32>
    %c0_1 = arith.constant 0 : index
    %c0_2 = arith.constant 0 : index
    %1 = vector.load %arg2[%c0_1, %c0_2] : memref<128x256xf32, #tpu.memory_space<vmem>>, vector<128x256xf32>
    %cst = arith.constant dense<0.000000e+00> : vector<1x256xf32>
    %2 = tpu.matmul %0, %1, %cst {dimension_numbers = #tpu.dot_dimension_numbers<[1], [0], [0], [1], [0, 0, 1, 1], [], []>} : vector<1x128xf32>, vector<128x256xf32>, vector<1x256xf32> -> vector<1x256xf32>
    %c0_3 = arith.constant 0 : index
    %c0_4 = arith.constant 0 : index
    %3 = vector.load %arg3[%c0_3, %c0_4] : memref<1x256xf32, #tpu.memory_space<vmem>>, vector<1x256xf32>
    %4 = arith.addf %2, %3 : vector<1x256xf32>
    %cst_5 = arith.constant 0.000000e+00 : f32
    %5 = vector.broadcast %cst_5 : f32 to vector<1x256xf32>
    %6 = arith.maximumf %4, %5 : vector<1x256xf32>
    %c0_6 = arith.constant 0 : index
    %c0_7 = arith.constant 0 : index
    %7 = vector.load %arg4[%c0_6, %c0_7] : memref<256x128xf32, #tpu.memory_space<vmem>>, vector<256x128xf32>
    %cst_8 = arith.constant dense<0.000000e+00> : vector<1x128xf32>
    %8 = tpu.matmul %6, %7, %cst_8 {dimension_numbers = #tpu.dot_dimension_numbers<[1], [0], [0], [1], [0, 0, 1, 1], [], []>} : vector<1x256xf32>, vector<256x128xf32>, vector<1x128xf32> -> vector<1x128xf32>
    %c0_9 = arith.constant 0 : index
    %c0_10 = arith.constant 0 : index
    %9 = vector.load %arg5[%c0_9, %c0_10] : memref<1x128xf32, #tpu.memory_space<vmem>>, vector<1x128xf32>
    %10 = arith.addf %8, %9 : vector<1x128xf32>
    %c0_11 = arith.constant 0 : index
    %c0_12 = arith.constant 0 : index
    %11 = vector.load %arg6[%c0_11, %c0_12] : memref<1x128xf32, #tpu.memory_space<vmem>>, vector<1x128xf32>
    tpu.vector_store %arg6[%c0_11, %c0_12], %10 {strides = array<i32>} : memref<1x128xf32, #tpu.memory_space<vmem>>, vector<1x128xf32>,
    return
  }
  func.func @transform_0(%arg0: i32) -> (i32, i32) {
    %c0_i32 = arith.constant 0 : i32
    %c0_i32_0 = arith.constant 0 : i32
    return %arg0, %c0_i32 : i32, i32
  }
  func.func @transform_1(%arg0: i32) -> (i32, i32) {
    %c0_i32 = arith.constant 0 : i32
    %c0_i32_0 = arith.constant 0 : i32
    %c0_i32_1 = arith.constant 0 : i32
    return %c0_i32, %c0_i32_0 : i32, i32
  }
  func.func @transform_2(%arg0: i32) -> (i32, i32) {
    %c0_i32 = arith.constant 0 : i32
    %c0_i32_0 = arith.constant 0 : i32
    %c0_i32_1 = arith.constant 0 : i32
    return %c0_i32, %c0_i32_0 : i32, i32
  }
  func.func @transform_3(%arg0: i32) -> (i32, i32) {
    %c0_i32 = arith.constant 0 : i32
    %c0_i32_0 = arith.constant 0 : i32
    %c0_i32_1 = arith.constant 0 : i32
    return %c0_i32, %c0_i32_0 : i32, i32
  }
  func.func @transform_4(%arg0: i32) -> (i32, i32) {
    %c0_i32 = arith.constant 0 : i32
    %c0_i32_0 = arith.constant 0 : i32
    %c0_i32_1 = arith.constant 0 : i32
    return %c0_i32, %c0_i32_0 : i32, i32
  }
  func.func @transform_5(%arg0: i32) -> (i32, i32) {
    %c0_i32 = arith.constant 0 : i32
    %c0_i32_0 = arith.constant 0 : i32
    return %arg0, %c0_i32 : i32, i32
  }
}

</mosaic_0001>

<llo_original>
// kernel: tile.13
$region0: #{tile.13}
  #allocation0 [shape = 's32[1]{0}', space=sflag, size = 0x4, scoped, tag = 'scoped memory for tile.13']
  %s0 = inlined_call_operand.vmem [shape: f32[16], index: 0, kind: input, shape index: {}]
  %s1 = inlined_call_operand.vmem [shape: f32[16,16], index: 1, kind: output, shape index: {}]
  // Predicated region
  $region2: #{tile.13} parent=0 // pred_check
    _
  $region3: #{tile.13} parent=0 // pred_check_branch
    %3 = sbr.rel (0) target = $region5
  $region4: #{tile.13} parent=0 // pred_region
    _
  $region5: #{tile.13} parent=0 // pred_fallthru
    _
  %v4 = vld [vmem:[%s0] ss:$0 sm:$0xff]
  %5 = vst [vmem:[%s1] sm:$0xff] %v4
  %s6 = scalar_lea.vmem %s1, 8
  %7 = vst [vmem:[%s6] sm:$0xff] %v4

// kernel: tile.14
$region0: #{tile.14}
  %s0 = inlined_call_operand.vmem [shape: f32[16,16], index: 0, kind: input, shape index: {}]
  %s1 = inlined_call_operand.vmem [shape: f32[1,256], index: 1, kind: output, shape index: {}]
  $region1: #{tile.14} parent=0
    #allocation0 [shape = 'u8[8192]{0}', space=vmem, size = 0x2000, scoped, tag = 'scoped mem for output reshape']
    %s2 = smov 3
    %v3 = vld [vmem:[%s0] ss:$8 sm:%s2]
    %vm4 = vcmask 130048
    %5 = vst.msk [vmem:[#allocation0] ss:$8 sm:$0x3] %vm4, %v3
    %s6 = scalar_lea.vmem %s0, 7
    %s7 = smov 3
    %v8 = vld [vmem:[%s6] ss:$8 sm:%s7]
    %9 = vrot.lane.b32.xlu0 %v8, 112
    %v10 = vpop.permute.xlu0 %9
    %vm11 = vcmask 1048448
    %12 = vst.msk [vmem:[#allocation0] ss:$8 sm:$0x3] %vm11, %v10
    %s13 = scalar_lea.vmem %s0, 6
    %s14 = smov 3
    %v15 = vld [vmem:[%s13] ss:$8 sm:%s14]
    %16 = vrot.lane.b32.xlu0 %v15, 96
    %v17 = vpop.permute.xlu0 %16
    %vm18 = vcmask 917248
    %19 = vst.msk [vmem:[#allocation0] ss:$8 sm:$0x3] %vm18, %v17
    %s20 = scalar_lea.vmem %s0, 5
    %s21 = smov 3
    %v22 = vld [vmem:[%s20] ss:$8 sm:%s21]
    %23 = vrot.lane.b32.xlu0 %v22, 80
    %v24 = vpop.permute.xlu0 %23
    %vm25 = vcmask 786048
    %26 = vst.msk [vmem:[#allocation0] ss:$8 sm:$0x3] %vm25, %v24
    %s27 = scalar_lea.vmem %s0, 4
    %s28 = smov 3
    %v29 = vld [vmem:[%s27] ss:$8 sm:%s28]
    %30 = vrot.lane.b32.xlu0 %v29, 64
    %v31 = vpop.permute.xlu0 %30
    %vm32 = vcmask 654848
    %33 = vst.msk [vmem:[#allocation0] ss:$8 sm:$0x3] %vm32, %v31
    %s34 = scalar_lea.vmem %s0, 3
    %s35 = smov 3
    %v36 = vld [vmem:[%s34] ss:$8 sm:%s35]
    %37 = vrot.lane.b32.xlu0 %v36, 48
    %v38 = vpop.permute.xlu0 %37
    %vm39 = vcmask 523648
    %40 = vst.msk [vmem:[#allocation0] ss:$8 sm:$0x3] %vm39, %v38
    %s41 = scalar_lea.vmem %s0, 2
    %s42 = smov 3
    %v43 = vld [vmem:[%s41] ss:$8 sm:%s42]
    %44 = vrot.lane.b32.xlu0 %v43, 32
    %v45 = vpop.permute.xlu0 %44
    %vm46 = vcmask 392448
    %47 = vst.msk [vmem:[#allocation0] ss:$8 sm:$0x3] %vm46, %v45
    %s48 = scalar_lea.vmem %s0, 1
    %s49 = smov 3
    %v50 = vld [vmem:[%s48] ss:$8 sm:%s49]
    %51 = vrot.lane.b32.xlu0 %v50, 16
    %v52 = vpop.permute.xlu0 %51
    %vm53 = vcmask 261248
    %54 = vst.msk [vmem:[#allocation0] ss:$8 sm:$0x3] %vm53, %v52
    %s56 = sshll.u32 1, 1
    %s57 = ssub.s32 %s56, 1
    %v59 = vld [vmem:[#allocation0] sm:%s57]
    %s60 = sshll.u32 1, 1
    %s61 = ssub.s32 %s60, 1
    %62 = vst [vmem:[%s1] sm:%s61] %v59
    %s63 = scalar_lea.vmem [#allocation0], 8
    %v64 = vld [vmem:[%s63] sm:%s57]
    %s65 = sshll.u32 1, 1
    %s66 = ssub.s32 %s65, 1
    %s67 = scalar_lea.vmem %s1, 1
    %68 = vst [vmem:[%s67] sm:%s66] %v64

// kernel: tile.18
$region0: #{tile.18}
  #allocation0 [shape = 's32[1]{0}', space=sflag, size = 0x4, scoped, tag = 'scoped memory for tile.18']
  %s0 = inlined_call_operand.vmem [shape: f32[8], index: 0, kind: input, shape index: {}]
  %s1 = inlined_call_operand.vmem [shape: f32[16,8], index: 1, kind: output, shape index: {}]
  // Predicated region
  $region2: #{tile.18} parent=0 // pred_check
    _
  $region3: #{tile.18} parent=0 // pred_check_branch
    %3 = sbr.rel (0) target = $region5
  $region4: #{tile.18} parent=0 // pred_region
    _
  $region5: #{tile.18} parent=0 // pred_fallthru
    _
  %v4 = vld [vmem:[%s0] ss:$0 sm:$0xff]
  %5 = vst [vmem:[%s1] sm:$0xff] %v4
  %s6 = scalar_lea.vmem %s1, 8
  %7 = vst [vmem:[%s6] sm:$0xff] %v4

// kernel: dqn_forward.1
$region0: #{dqn_forward.1}
  #allocation0 [shape = 'u32[]', space=smem, size = 0x4, offset = 0x4, fixed_abs, tag = 'smem constant byte address 0x4 - core index']
  #allocation1 [shape = 'u32[144,128]{1,0:T(1,128)}', space=vmem, size = 0x12000, scoped, tag = 'internal scratch']
  %s0 = inlined_call_operand.vmem [shape: f32[1,128], index: 0, kind: input, shape index: {}]
  %s1 = inlined_call_operand.vmem [shape: f32[128,256], index: 1, kind: input, shape index: {}]
  %s2 = inlined_call_operand.vmem [shape: f32[1,256], index: 2, kind: input, shape index: {}]
  %s3 = inlined_call_operand.vmem [shape: f32[256,128], index: 3, kind: input, shape index: {}]
  %s4 = inlined_call_operand.vmem [shape: f32[1,128], index: 4, kind: input, shape index: {}]
  %s5 = inlined_call_operand.vmem [shape: f32[1,128], index: 5, kind: output, shape index: {}]
  %s6 = sld [smem:[#allocation0]]
  $region30: #{dqn_forward.1} parent=0
    _
  %s8 = ssub.s32 1, %s6
  %s9 = scalar_select 0, %s8, %s6
  // Predicated region
  $region2: #{dqn_forward.1} parent=0 // pred_check
    _
  $region3: #{dqn_forward.1} parent=0 // pred_check_branch
    %11 = sbr.rel (0) target = $region5
  $region4: #{dqn_forward.1} parent=0 // pred_region
    _
  $region5: #{dqn_forward.1} parent=0 // pred_fallthru
    _
  // Predicated region
  $region6: #{dqn_forward.1} parent=0 // pred_check
    _
  $region7: #{dqn_forward.1} parent=0 // pred_check_branch
    %13 = sbr.rel (0) target = $region9
  $region8: #{dqn_forward.1} parent=0 // pred_region
    _
  $region9: #{dqn_forward.1} parent=0 // pred_fallthru
    _
  // Predicated region
  $region10: #{dqn_forward.1} parent=0 // pred_check
    _
  $region11: #{dqn_forward.1} parent=0 // pred_check_branch
    %15 = sbr.rel (0) target = $region13
  $region12: #{dqn_forward.1} parent=0 // pred_region
    _
  $region13: #{dqn_forward.1} parent=0 // pred_fallthru
    _
  // Predicated region
  $region14: #{dqn_forward.1} parent=0 // pred_check
    _
  $region15: #{dqn_forward.1} parent=0 // pred_check_branch
    %17 = sbr.rel (0) target = $region17
  $region16: #{dqn_forward.1} parent=0 // pred_region
    _
  $region17: #{dqn_forward.1} parent=0 // pred_fallthru
    _
  // Predicated region
  $region18: #{dqn_forward.1} parent=0 // pred_check
    _
  $region19: #{dqn_forward.1} parent=0 // pred_check_branch
    %19 = sbr.rel (0) target = $region21
  $region20: #{dqn_forward.1} parent=0 // pred_region
    _
  $region21: #{dqn_forward.1} parent=0 // pred_fallthru
    _
  %v20 = vld [vmem:[%s0] sm:$0x1]
  %v21 = vld [vmem:[%s1] sm:$0xff]
  %v22 = vld [vmem:[%s1 + $0x8] sm:$0xff]
  %v23 = vld [vmem:[%s1 + $0x10] sm:$0xff]
  %v24 = vld [vmem:[%s1 + $0x18] sm:$0xff]
  %v25 = vld [vmem:[%s1 + $0x20] sm:$0xff]
  %v26 = vld [vmem:[%s1 + $0x28] sm:$0xff]
  %v27 = vld [vmem:[%s1 + $0x30] sm:$0xff]
  %v28 = vld [vmem:[%s1 + $0x38] sm:$0xff]
  %v29 = vld [vmem:[%s1 + $0x40] sm:$0xff]
  %v30 = vld [vmem:[%s1 + $0x48] sm:$0xff]
  %v31 = vld [vmem:[%s1 + $0x50] sm:$0xff]
  %v32 = vld [vmem:[%s1 + $0x58] sm:$0xff]
  %v33 = vld [vmem:[%s1 + $0x60] sm:$0xff]
  %v34 = vld [vmem:[%s1 + $0x68] sm:$0xff]
  %v35 = vld [vmem:[%s1 + $0x70] sm:$0xff]
  %v36 = vld [vmem:[%s1 + $0x78] sm:$0xff]
  %v37 = vld [vmem:[%s1 + $0x80] sm:$0xff]
  %v38 = vld [vmem:[%s1 + $0x88] sm:$0xff]
  %v39 = vld [vmem:[%s1 + $0x90] sm:$0xff]
  %v40 = vld [vmem:[%s1 + $0x98] sm:$0xff]
  %v41 = vld [vmem:[%s1 + $0xa0] sm:$0xff]
  %v42 = vld [vmem:[%s1 + $0xa8] sm:$0xff]
  %v43 = vld [vmem:[%s1 + $0xb0] sm:$0xff]
  %v44 = vld [vmem:[%s1 + $0xb8] sm:$0xff]
  %v45 = vld [vmem:[%s1 + $0xc0] sm:$0xff]
  %v46 = vld [vmem:[%s1 + $0xc8] sm:$0xff]
  %v47 = vld [vmem:[%s1 + $0xd0] sm:$0xff]
  %v48 = vld [vmem:[%s1 + $0xd8] sm:$0xff]
  %v49 = vld [vmem:[%s1 + $0xe0] sm:$0xff]
  %v50 = vld [vmem:[%s1 + $0xe8] sm:$0xff]
  %v51 = vld [vmem:[%s1 + $0xf0] sm:$0xff]
  %v52 = vld [vmem:[%s1 + $0xf8] sm:$0xff]
  %v53 = vld [vmem:[%s2] sm:$0x3]
  %v55 = vlaneseq
  %v56 = vshrl.u32 %v55, 7
  %v57 = vsub.s32 0, %v56
  %v58 = vrot.slane %v53, %v57
  %v59 = vlaneseq
  %v60 = vshrl.u32 %v59, 7
  %v61 = vsub.s32 1, %v60
  %v62 = vrot.slane %v53, %v61
  %65 = vmatprep.subr.mxu0 %v52
  %66 = vmatpush1.msra.mxu0 %v51
  %67 = vmatprep.subr.mxu0 %v50
  %68 = vmatpush1.msra.mxu0 %v49
  %69 = vmatprep.subr.mxu0 %v48
  %70 = vmatpush1.msra.mxu0 %v47
  %71 = vmatprep.subr.mxu0 %v46
  %72 = vmatpush1.msra.mxu0 %v45
  %73 = vmatprep.subr.mxu0 %v44
  %74 = vmatpush1.msra.mxu0 %v43
  %75 = vmatprep.subr.mxu0 %v42
  %76 = vmatpush1.msra.mxu0 %v41
  %77 = vmatprep.subr.mxu0 %v40
  %78 = vmatpush1.msra.mxu0 %v39
  %79 = vmatprep.subr.mxu0 %v38
  %80 = vmatpush1.msra.mxu0 %v37
  %81 = vmatprep.subr.mxu0 %v36
  %82 = vmatpush1.msra.mxu0 %v35
  %83 = vmatprep.subr.mxu0 %v34
  %84 = vmatpush1.msra.mxu0 %v33
  %85 = vmatprep.subr.mxu0 %v32
  %86 = vmatpush1.msra.mxu0 %v31
  %87 = vmatprep.subr.mxu0 %v30
  %88 = vmatpush1.msra.mxu0 %v29
  %89 = vmatprep.subr.mxu0 %v28
  %90 = vmatpush1.msra.mxu0 %v27
  %91 = vmatprep.subr.mxu0 %v26
  %92 = vmatpush1.msra.mxu0 %v25
  %93 = vmatprep.subr.mxu0 %v24
  %94 = vmatpush1.msra.mxu0 %v23
  %95 = vmatprep.subr.mxu0 %v22
  %96 = vmatpush1.msra.mxu0 %v21
  %97 = vmatprep.subr.mxu0 0.0
  %98 = vmatpush2.msra.mxu0 0.0
  %99 = vmatprep.subr.mxu0 0.0
  %100 = vmatpush2.msra.mxu0 0.0
  %101 = vmatprep.subr.mxu0 0.0
  %102 = vmatpush2.msra.mxu0 0.0
  %103 = vmatprep.subr.mxu0 0.0
  %104 = vmatpush2.msra.mxu0 0.0
  %105 = vmatprep.subr.mxu0 0.0
  %106 = vmatpush2.msra.mxu0 0.0
  %107 = vmatprep.subr.mxu0 0.0
  %108 = vmatpush2.msra.mxu0 0.0
  %109 = vmatprep.subr.mxu0 0.0
  %110 = vmatpush2.msra.mxu0 0.0
  %111 = vmatprep.subr.mxu0 0.0
  %112 = vmatpush2.msra.mxu0 0.0
  %113 = vmatprep.subr.mxu0 0.0
  %114 = vmatpush2.msra.mxu0 0.0
  %115 = vmatprep.subr.mxu0 0.0
  %116 = vmatpush2.msra.mxu0 0.0
  %117 = vmatprep.subr.mxu0 0.0
  %118 = vmatpush2.msra.mxu0 0.0
  %119 = vmatprep.subr.mxu0 0.0
  %120 = vmatpush2.msra.mxu0 0.0
  %121 = vmatprep.subr.mxu0 0.0
  %122 = vmatpush2.msra.mxu0 0.0
  %123 = vmatprep.subr.mxu0 0.0
  %124 = vmatpush2.msra.mxu0 0.0
  %125 = vmatprep.subr.mxu0 0.0
  %126 = vmatpush2.msra.mxu0 0.0
  %127 = vmatprep.subr.mxu0 0.0
  %128 = vmatpush2.msra.mxu0 0.0
  %129 = vmatprep.mubr.f32.mxu0 0.0
  %130 = vmatmul.mubr.f32.gmra.mxu0 %v20
  %v131 = vpop.f32.mrf.mxu0
  %v132 = vadd.f32 %v58, %v131
  %v133 = vpop.f32.mrf.mxu0
  %v134 = vadd.f32 %v62, %v133
  %135 = vdwg.mxu0
  %v136 = vmax.f32 %v132, 0.0
  %v137 = vmax.f32 %v134, 0.0
  %v138 = vld [vmem:[%s3] sm:$0xff]
  %v139 = vld [vmem:[%s3 + $0x8] sm:$0xff]
  %v140 = vld [vmem:[%s3 + $0x10] sm:$0xff]
  %v141 = vld [vmem:[%s3 + $0x18] sm:$0xff]
  %v142 = vld [vmem:[%s3 + $0x20] sm:$0xff]
  %v143 = vld [vmem:[%s3 + $0x28] sm:$0xff]
  %v144 = vld [vmem:[%s3 + $0x30] sm:$0xff]
  %v145 = vld [vmem:[%s3 + $0x38] sm:$0xff]
  %v146 = vld [vmem:[%s3 + $0x40] sm:$0xff]
  %v147 = vld [vmem:[%s3 + $0x48] sm:$0xff]
  %v148 = vld [vmem:[%s3 + $0x50] sm:$0xff]
  %v149 = vld [vmem:[%s3 + $0x58] sm:$0xff]
  %v150 = vld [vmem:[%s3 + $0x60] sm:$0xff]
  %v151 = vld [vmem:[%s3 + $0x68] sm:$0xff]
  %v152 = vld [vmem:[%s3 + $0x70] sm:$0xff]
  %v153 = vld [vmem:[%s3 + $0x78] sm:$0xff]
  %v154 = vld [vmem:[%s3 + $0x80] sm:$0xff]
  %v155 = vld [vmem:[%s3 + $0x88] sm:$0xff]
  %v156 = vld [vmem:[%s3 + $0x90] sm:$0xff]
  %v157 = vld [vmem:[%s3 + $0x98] sm:$0xff]
  %v158 = vld [vmem:[%s3 + $0xa0] sm:$0xff]
  %v159 = vld [vmem:[%s3 + $0xa8] sm:$0xff]
  %v160 = vld [vmem:[%s3 + $0xb0] sm:$0xff]
  %v161 = vld [vmem:[%s3 + $0xb8] sm:$0xff]
  %v162 = vld [vmem:[%s3 + $0xc0] sm:$0xff]
  %v163 = vld [vmem:[%s3 + $0xc8] sm:$0xff]
  %v164 = vld [vmem:[%s3 + $0xd0] sm:$0xff]
  %v165 = vld [vmem:[%s3 + $0xd8] sm:$0xff]
  %v166 = vld [vmem:[%s3 + $0xe0] sm:$0xff]
  %v167 = vld [vmem:[%s3 + $0xe8] sm:$0xff]
  %v168 = vld [vmem:[%s3 + $0xf0] sm:$0xff]
  %v169 = vld [vmem:[%s3 + $0xf8] sm:$0xff]
  %v170 = vld [vmem:[%s4] sm:$0x1]
  %171 = vmatprep.subr.mxu0 0.0
  %172 = vmatpush1.msra.mxu0 %v153
  %173 = vmatprep.subr.mxu0 0.0
  %174 = vmatpush1.msra.mxu0 %v152
  %175 = vmatprep.subr.mxu0 0.0
  %176 = vmatpush1.msra.mxu0 %v151
  %177 = vmatprep.subr.mxu0 0.0
  %178 = vmatpush1.msra.mxu0 %v150
  %179 = vmatprep.subr.mxu0 0.0
  %180 = vmatpush1.msra.mxu0 %v149
  %181 = vmatprep.subr.mxu0 0.0
  %182 = vmatpush1.msra.mxu0 %v148
  %183 = vmatprep.subr.mxu0 0.0
  %184 = vmatpush1.msra.mxu0 %v147
  %185 = vmatprep.subr.mxu0 0.0
  %186 = vmatpush1.msra.mxu0 %v146
  %187 = vmatprep.subr.mxu0 0.0
  %188 = vmatpush1.msra.mxu0 %v145
  %189 = vmatprep.subr.mxu0 0.0
  %190 = vmatpush1.msra.mxu0 %v144
  %191 = vmatprep.subr.mxu0 0.0
  %192 = vmatpush1.msra.mxu0 %v143
  %193 = vmatprep.subr.mxu0 0.0
  %194 = vmatpush1.msra.mxu0 %v142
  %195 = vmatprep.subr.mxu0 0.0
  %196 = vmatpush1.msra.mxu0 %v141
  %197 = vmatprep.subr.mxu0 0.0
  %198 = vmatpush1.msra.mxu0 %v140
  %199 = vmatprep.subr.mxu0 0.0
  %200 = vmatpush1.msra.mxu0 %v139
  %201 = vmatprep.subr.mxu0 0.0
  %202 = vmatpush1.msra.mxu0 %v138
  %203 = vmatprep.subr.mxu0 0.0
  %204 = vmatpush2.msra.mxu0 %v169
  %205 = vmatprep.subr.mxu0 0.0
  %206 = vmatpush2.msra.mxu0 %v168
  %207 = vmatprep.subr.mxu0 0.0
  %208 = vmatpush2.msra.mxu0 %v167
  %209 = vmatprep.subr.mxu0 0.0
  %210 = vmatpush2.msra.mxu0 %v166
  %211 = vmatprep.subr.mxu0 0.0
  %212 = vmatpush2.msra.mxu0 %v165
  %213 = vmatprep.subr.mxu0 0.0
  %214 = vmatpush2.msra.mxu0 %v164
  %215 = vmatprep.subr.mxu0 0.0
  %216 = vmatpush2.msra.mxu0 %v163
  %217 = vmatprep.subr.mxu0 0.0
  %218 = vmatpush2.msra.mxu0 %v162
  %219 = vmatprep.subr.mxu0 0.0
  %220 = vmatpush2.msra.mxu0 %v161
  %221 = vmatprep.subr.mxu0 0.0
  %222 = vmatpush2.msra.mxu0 %v160
  %223 = vmatprep.subr.mxu0 0.0
  %224 = vmatpush2.msra.mxu0 %v159
  %225 = vmatprep.subr.mxu0 0.0
  %226 = vmatpush2.msra.mxu0 %v158
  %227 = vmatprep.subr.mxu0 0.0
  %228 = vmatpush2.msra.mxu0 %v157
  %229 = vmatprep.subr.mxu0 0.0
  %230 = vmatpush2.msra.mxu0 %v156
  %231 = vmatprep.subr.mxu0 0.0
  %232 = vmatpush2.msra.mxu0 %v155
  %233 = vmatprep.subr.mxu0 0.0
  %234 = vmatpush2.msra.mxu0 %v154
  %235 = vmatprep.mubr.f32.mxu0 %v137
  %236 = vmatmul.mubr.f32.gmra.mxu0 %v136
  %v237 = vpop.f32.mrf.mxu0
  %v238 = vadd.f32 %v170, %v237
  %v239 = vpop.f32.mrf.mxu0
  %240 = vdwg.mxu0
  %241 = vst [vmem:[%s5] sm:$0x1] %v238
  // Predicated region
  $region22: #{dqn_forward.1} parent=0 // pred_check
    _
  $region23: #{dqn_forward.1} parent=0 // pred_check_branch
    %243 = sbr.rel (0) target = $region25
  $region24: #{dqn_forward.1} parent=0 // pred_region
    _
  $region25: #{dqn_forward.1} parent=0 // pred_fallthru
    _
  // Predicated region
  $region26: #{dqn_forward.1} parent=0 // pred_check
    _
  $region27: #{dqn_forward.1} parent=0 // pred_check_branch
    %245 = sbr.rel (0) target = $region29
  $region28: #{dqn_forward.1} parent=0 // pred_region
    _
  $region29: #{dqn_forward.1} parent=0 // pred_fallthru
    _

</llo_original>
